<compile_context>
chip_gen: v7x
topology: tpu7x:2x2x1
jax: 0.10.0
libtpu: 0.0.40
codegen_flags: <defaults>
</compile_context>

<pallas_src>
import numpy as np
import jax
import jax.numpy as jnp
from jax.experimental import pallas as pl
from jax.experimental.pallas import tpu as pltpu


def _round_up(a, b):
    return -(-a // b) * b


def _gaussian_kernel_1d(ksize, sigma):
    # Matches torch getGaussiankernel: arange(-(k-1)//2, (k-1)//2 + 1), exp, normalize.
    x = np.arange(-(ksize - 1) // 2, (ksize - 1) // 2 + 1).astype(np.float32)
    if sigma <= 0:
        # sf == 1 gives sigma = 1 // 1.5 == 0 (torch would produce NaNs); use a delta.
        k = np.ones_like(x)
    else:
        k = np.exp(np.float32(-0.5) * np.square(x / np.float32(sigma))).astype(np.float32)
    return (k / k.sum()).astype(np.float32)


def _vmem_capacity_bytes():
    try:
        info = pltpu.get_tpu_info()
        cap = getattr(info, "vmem_capacity_bytes", None)
        if cap:
            return int(cap)
    except Exception:
        pass
    return 64 << 20          # conservative fallback (v7x per-TensorCore VMEM)


def _pick_wo_tile(Wo):
    """Output-column tile Nt: MXU/lane friendly when it divides Wo, else one full tile."""
    for nt in (256, 128):
        if Wo % nt == 0:
            return nt
    return Wo


def _pick_row_block(M, per_row_bytes, budget_bytes, min_steps):
    """Row block: multiple of 8 (or == M), fits the VMEM budget, prefers >= min_steps
    grid steps along the row axis for pipeline steady state / megacore."""
    if M <= 8:
        return M
    cap = max(8, (int(budget_bytes // max(per_row_bytes, 1)) // 8) * 8)
    cap = min(cap, (M // 8) * 8)
    pref = max(8, (max(1, M // max(min_steps, 1)) // 8) * 8)
    mb = max(8, min(cap, pref))
    # Prefer an exact divisor of M (no ragged last block) at or below mb.
    for d in range(mb, 7, -8):
        if M % d == 0:
            return d
    return mb                # ragged last block; Pallas masks the out-of-range rows


def _make_spa_down_kernel(g, sf):
    g = tuple(float(v) for v in g)

    def kernel(dwt_ref, x_ref, o_ref):
        # x_ref: (Mb, sf, Wct).  Phase p is a full lane-aligned (Mb, Wct) slab.
        t = g[0] * x_ref[:, 0, :]
        for p in range(1, sf):
            t = t + g[p] * x_ref[:, p, :]            # H-side strided conv (VPU fma)
        # W-side strided conv for this Wo tile: one small MXU matmul against the
        # grid-invariant block-diagonal operator (Wct = Nt*sf rows, Nt cols).
        o_ref[...] = jnp.dot(t, dwt_ref[...],
                             preferred_element_type=jnp.float32).astype(o_ref.dtype)

    return kernel


def spatial_degradation(x, sf):
    """x: (1, C, H, W) -> (1, C, H//sf, W//sf); same as the PyTorch module's forward."""
    assert x.ndim == 4 and x.shape[0] == 1, "Spatial_Degradation (batch=1) needs batch==1"
    _, C, H, W = x.shape
    assert H >= sf and W >= sf
    Ho, Wo = H // sf, W // sf
    Hc, Wc = Ho * sf, Wo * sf
    M = C * Ho

    # sf // 1.5 (floor) intentionally matches the PyTorch module's quirk.
    g = _gaussian_kernel_1d(sf, sf // 1.5)

    # Wo tiling (block-diagonal operator).
    Nt = _pick_wo_tile(Wo)
    Wct = Nt * sf
    n_j = Wo // Nt

    # W-side operator for ONE Wo tile (identical for every tile), pre-transposed to
    # (Wct, Nt) so the MXU consumes a lane-contiguous RHS directly (no in-kernel .T).
    dwt_np = np.zeros((Wct, Nt), np.float32)
    for n in range(Nt):
        dwt_np[n * sf:(n + 1) * sf, n] = g
    dwt = jnp.asarray(dwt_np)

    # Zero-copy view (1, C, H, W) -> (M, sf, Wc): crop only when there is a remainder,
    # otherwise no wrapper-side HBM copy is made at all.
    xs = x[0] if (H == Hc and W == Wc) else x[0, :, :Hc, :Wc]
    x3 = xs.reshape(M, sf, Wc)

    # VMEM accounting: double-buffered padded input block + double-buffered output block
    # + double-buffered (tiny, grid-invariant) operator.
    itemsize = x.dtype.itemsize
    sf_pad = _round_up(sf, 8)                       # sublane padding of the phase axis
    wct_pad = _round_up(Wct, 128)
    nt_pad = _round_up(Nt, 128)
    per_row_bytes = 2 * (sf_pad * wct_pad * itemsize + nt_pad * itemsize)
    dwt_bytes = 2 * _round_up(Wct, 8) * nt_pad * 4
    vmem_cap = _vmem_capacity_bytes()
    budget_total = min(vmem_cap // 4, 24 << 20)     # ~16 MiB on v7x, 24 MiB on v5e/v6e
    budget_rows = max(budget_total - dwt_bytes, 8 * per_row_bytes)
    min_row_steps = max(1, -(-8 // n_j))            # prefer >= 8 total grid steps
    Mb = _pick_row_block(M, per_row_bytes, budget_rows, min_row_steps)
    n_i = pl.cdiv(M, Mb)

    footprint = Mb * per_row_bytes + dwt_bytes
    vmem_limit = max(int(footprint) + (4 << 20), 16 << 20)
    vmem_limit = min(vmem_limit, (vmem_cap * 3) // 4)

    out2d = pl.pallas_call(
        _make_spa_down_kernel(g, sf),
        out_shape=jax.ShapeDtypeStruct((M, Wo), x.dtype),
        grid_spec=pltpu.PrefetchScalarGridSpec(
            num_scalar_prefetch=0,
            grid=(n_i, n_j),
            in_specs=[
                pl.BlockSpec((Wct, Nt), lambda i, j: (0, 0)),         # operator (resident)
                pl.BlockSpec((Mb, sf, Wct), lambda i, j: (i, 0, j)),  # x tile for (i, j)
            ],
            out_specs=pl.BlockSpec((Mb, Nt), lambda i, j: (i, j)),
        ),
        compiler_params=pltpu.CompilerParams(
            dimension_semantics=("parallel", "parallel"),
            vmem_limit_bytes=int(vmem_limit),
        ),
    )(dwt, x3)

    return out2d.reshape(1, C, Ho, Wo)


def spatial_degradation_reference(x, sf):
    """Pure-JAX reference: stride-sf 2D conv with the (non-separated) Gaussian kernel."""
    g = jnp.asarray(_gaussian_kernel_1d(sf, sf // 1.5))
    K = jnp.outer(g, g)                                               # (sf, sf)
    B, C, H, W = x.shape
    Ho, Wo = H // sf, W // sf
    patches = x[:, :, :Ho * sf, :Wo * sf].reshape(B, C, Ho, sf, Wo, sf)
    return jnp.einsum("bchpwq,pq->bchw", patches, K,
                      precision=jax.lax.Precision.HIGHEST)


if __name__ == "__main__":
    sf = 4

    # Case 1: typical tiny config (batch must be 1, as in the PyTorch module).
    x1 = jax.random.normal(jax.random.PRNGKey(0), (1, 8, 32, 32), dtype=jnp.float32)
    out1 = jax.block_until_ready(spatial_degradation(x1, sf))
    ref1 = spatial_degradation_reference(x1, sf)
    assert out1.shape == (1, 8, 8, 8), out1.shape
    assert jnp.allclose(out1, ref1, atol=1e-5, rtol=1e-5), \
        float(jnp.max(jnp.abs(out1 - ref1)))

    # Case 2: exercises the lane-dense Wo tiling (Nt=128, 3 column tiles, multiple row
    # blocks) and the remainder crop (H, W not multiples of sf).
    x2 = jax.random.normal(jax.random.PRNGKey(0), (1, 2, 33, 1537), dtype=jnp.float32)
    out2 = jax.block_until_ready(spatial_degradation(x2, sf))
    ref2 = spatial_degradation_reference(x2, sf)
    assert out2.shape == (1, 2, 8, 384), out2.shape
    assert jnp.allclose(out2, ref2, atol=1e-5, rtol=1e-5), \
        float(jnp.max(jnp.abs(out2 - ref2)))

    print("KERNEL_OK")
</pallas_src>

<mosaic_0001>
module attributes {stable_mosaic.version = 11 : i64} {
  func.func @kernel(%arg0: i32, %arg1: i32, %arg2: memref<32x8xf32, #tpu.memory_space<vmem>>, %arg3: memref<8x4x32xf32, #tpu.memory_space<vmem>>, %arg4: memref<8x8xf32, #tpu.memory_space<vmem>>) attributes {dimension_semantics = [#tpu.dimension_semantics<parallel>, #tpu.dimension_semantics<parallel>], iteration_bounds = array<i64: 8, 1>, scalar_prefetch = 0 : i64, scratch_operands = 0 : i64, tpu.core_type = #tpu.core_type<tc>, window_params = [{pipeline_mode = #tpu.pipeline_mode<synchronous>, transform_indices = @transform_0, window_bounds = array<i64: 32, 8>}, {transform_indices = @transform_1, window_bounds = array<i64: 8, 4, 32>}, {transform_indices = @transform_2, window_bounds = array<i64: 8, 8>}]} {
    %c0 = arith.constant 0 : index
    %c0_0 = arith.constant 0 : index
    %c0_1 = arith.constant 0 : index
    %0 = vector.load %arg3[%c0, %c0_0, %c0_1] : memref<8x4x32xf32, #tpu.memory_space<vmem>>, vector<8x1x32xf32>
    %1 = vector.shape_cast %0 : vector<8x1x32xf32> to vector<8x32xf32>
    %cst = arith.constant 0.179898053 : f32
    %2 = vector.broadcast %cst : f32 to vector<8x32xf32>
    %3 = arith.mulf %2, %1 : vector<8x32xf32>
    %c0_2 = arith.constant 0 : index
    %c1 = arith.constant 1 : index
    %c0_3 = arith.constant 0 : index
    %4 = vector.load %arg3[%c0_2, %c1, %c0_3] : memref<8x4x32xf32, #tpu.memory_space<vmem>>, vector<8x1x32xf32>
    %5 = vector.shape_cast %4 : vector<8x1x32xf32> to vector<8x32xf32>
    %cst_4 = arith.constant 0.261750132 : f32
    %6 = vector.broadcast %cst_4 : f32 to vector<8x32xf32>
    %7 = arith.mulf %6, %5 : vector<8x32xf32>
    %8 = arith.addf %3, %7 : vector<8x32xf32>
    %c0_5 = arith.constant 0 : index
    %c2 = arith.constant 2 : index
    %c0_6 = arith.constant 0 : index
    %9 = vector.load %arg3[%c0_5, %c2, %c0_6] : memref<8x4x32xf32, #tpu.memory_space<vmem>>, vector<8x1x32xf32>
    %10 = vector.shape_cast %9 : vector<8x1x32xf32> to vector<8x32xf32>
    %cst_7 = arith.constant 0.296601743 : f32
    %11 = vector.broadcast %cst_7 : f32 to vector<8x32xf32>
    %12 = arith.mulf %11, %10 : vector<8x32xf32>
    %13 = arith.addf %8, %12 : vector<8x32xf32>
    %c0_8 = arith.constant 0 : index
    %c3 = arith.constant 3 : index
    %c0_9 = arith.constant 0 : index
    %14 = vector.load %arg3[%c0_8, %c3, %c0_9] : memref<8x4x32xf32, #tpu.memory_space<vmem>>, vector<8x1x32xf32>
    %15 = vector.shape_cast %14 : vector<8x1x32xf32> to vector<8x32xf32>
    %cst_10 = arith.constant 0.261750132 : f32
    %16 = vector.broadcast %cst_10 : f32 to vector<8x32xf32>
    %17 = arith.mulf %16, %15 : vector<8x32xf32>
    %18 = arith.addf %13, %17 : vector<8x32xf32>
    %c0_11 = arith.constant 0 : index
    %c0_12 = arith.constant 0 : index
    %19 = vector.load %arg2[%c0_11, %c0_12] : memref<32x8xf32, #tpu.memory_space<vmem>>, vector<32x8xf32>
    %cst_13 = arith.constant dense<0.000000e+00> : vector<8x8xf32>
    %20 = tpu.matmul %18, %19, %cst_13 {dimension_numbers = #tpu.dot_dimension_numbers<[1], [0], [0], [1], [0, 0, 1, 1], [], []>} : vector<8x32xf32>, vector<32x8xf32>, vector<8x8xf32> -> vector<8x8xf32>
    %c0_14 = arith.constant 0 : index
    %c0_15 = arith.constant 0 : index
    %21 = vector.load %arg4[%c0_14, %c0_15] : memref<8x8xf32, #tpu.memory_space<vmem>>, vector<8x8xf32>
    tpu.vector_store %arg4[%c0_14, %c0_15], %20 {strides = array<i32>} : memref<8x8xf32, #tpu.memory_space<vmem>>, vector<8x8xf32>,
    return
  }
  func.func @transform_0(%arg0: i32, %arg1: i32) -> (i32, i32) {
    %c0_i32 = arith.constant 0 : i32
    %c0_i32_0 = arith.constant 0 : i32
    %c0_i32_1 = arith.constant 0 : i32
    return %c0_i32, %c0_i32_0 : i32, i32
  }
  func.func @transform_1(%arg0: i32, %arg1: i32) -> (i32, i32, i32) {
    %c0_i32 = arith.constant 0 : i32
    %c0_i32_0 = arith.constant 0 : i32
    return %arg0, %c0_i32, %arg1 : i32, i32, i32
  }
  func.func @transform_2(%arg0: i32, %arg1: i32) -> (i32, i32) {
    %c0_i32 = arith.constant 0 : i32
    return %arg0, %arg1 : i32, i32
  }
}

</mosaic_0001>

<llo_original>
// kernel: tpu_custom_call.1
$region0: #{tpu_custom_call.1}
  #allocation0 [shape = 'u32[]', space=smem, size = 0x4, offset = 0x4, fixed_abs, tag = 'smem constant byte address 0x4 - core index']
  #allocation1 [shape = 'u32[144,128]{1,0:T(1,128)}', space=vmem, size = 0x12000, scoped, tag = 'internal scratch']
  %s0 = inlined_call_operand.vmem [shape: f32[32,8], index: 0, kind: input, shape index: {}]
  %s1 = inlined_call_operand.vmem [shape: f32[64,4,32], index: 1, kind: input, shape index: {}]
  %s2 = inlined_call_operand.vmem [shape: f32[64,8], index: 2, kind: output, shape index: {}]
  %s3 = sld [smem:[#allocation0]]
  $region41: #{tpu_custom_call.1} parent=0
    _
  %s5 = ssub.s32 1, %s3
  %s6 = scalar_select 0, %s5, %s3
  loop: start=0, step=1, limit=10
  $region2: #{tpu_custom_call.1} parent=0 // loop_pre_header
    _
  $region3: #{tpu_custom_call.1} parent=0 // loop_header
    %s8 = sphi 0, %s12
    %p9 = scmp.ge.s32.totalorder %s8, 10
    %s15 = sphi 0, %s27
    %s16 = sphi 0, %s23
    %s17 = sphi 0, %s15
    %s18 = sphi 0, %s16
    %s19 = sphi 0, %s17
    %s20 = sphi 0, %s18
    %s28 = sphi 0, %s28
    %s30 = sphi 0, %s28
    %s31 = sphi 0, %s30
    %s45 = sphi 0, %s31
    %s53 = sphi 0, %s55
    %s56 = sphi 0, %s53
    %s57 = sphi 0, %s56
    %s73 = sphi 0, %s57
    %s81 = sphi 0, %s83
    %s84 = sphi 0, %s81
    %s85 = sphi 0, %s84
    %s101 = sphi 0, %s85
  $region4: #{tpu_custom_call.1} parent=0 // loop_header_branch
    %11 = sbr.rel (%p9) target = $region8
  $region5: #{tpu_custom_call.1} parent=0 // loop_body
    %s13 = ssub.s32 %s8, 1
    %s14 = ssub.s32 %s8, 2
    %s21 = sadd.s32 1, %s16
    %p22 = scmp.ge.s32.totalorder %s21, 1
    %s23 = scalar_select %p22, 0, %s21
    %s24 = sadd.s32 1, %s15
    %s25 = scalar_select %p22, %s24, %s15
    %p26 = scmp.ge.s32.totalorder %s25, 8
    %s27 = scalar_select %p26, 0, %s25
    %s29 = sadd.s32 %s28, 1
    %p32 = scmp.eq.s32.totalorder %s8, 7
    %p33 = scmp.ne.s32.totalorder %s28, %s30
    %p34 = scmp.eq.s32.totalorder %s8, 0
    %p35 = por %p33, %p34
    %p36 = scmp.ne.s32.totalorder %s28, %s30
    %p37 = scmp.eq.s32.totalorder %s13, 7
    %p38 = por %p36, %p37
    %p39 = scmp.ne.s32.totalorder %s30, %s31
    %p40 = scmp.eq.s32.totalorder %s13, 0
    %p41 = por %p39, %p40
    %p42 = scmp.ne.s32.totalorder %s30, %s31
    %p43 = scmp.eq.s32.totalorder %s14, 7
    %p44 = por %p42, %p43
    %p46 = scmp.ne.s32.totalorder %s31, %s45
    %p47 = scmp.eq.s32.totalorder %s14, 0
    %p48 = por %p46, %p47
    %s49 = ssub.s32 %s15, %s27
    %s50 = ssub.s32 %s16, %s23
    %s51 = sor.u32 %s49, %s50
    %p52 = scmp.eq.s32.totalorder %s51, 0
    %s54 = sadd.s32 %s53, 1
    %s55 = scalar_select %p52, %s53, %s54
    %p58 = pneg %p52
    %p59 = scmp.eq.s32.totalorder %s8, 7
    %p60 = por %p58, %p59
    %p61 = scmp.ne.s32.totalorder %s53, %s56
    %p62 = scmp.eq.s32.totalorder %s8, 0
    %p63 = por %p61, %p62
    %p64 = scmp.ne.s32.totalorder %s53, %s56
    %p65 = scmp.eq.s32.totalorder %s13, 7
    %p66 = por %p64, %p65
    %p67 = scmp.ne.s32.totalorder %s56, %s57
    %p68 = scmp.eq.s32.totalorder %s13, 0
    %p69 = por %p67, %p68
    %p70 = scmp.ne.s32.totalorder %s56, %s57
    %p71 = scmp.eq.s32.totalorder %s14, 7
    %p72 = por %p70, %p71
    %p74 = scmp.ne.s32.totalorder %s57, %s73
    %p75 = scmp.eq.s32.totalorder %s14, 0
    %p76 = por %p74, %p75
    %s77 = ssub.s32 %s15, %s27
    %s78 = ssub.s32 %s16, %s23
    %s79 = sor.u32 %s77, %s78
    %p80 = scmp.eq.s32.totalorder %s79, 0
    %s82 = sadd.s32 %s81, 1
    %s83 = scalar_select %p80, %s81, %s82
    %p86 = pneg %p80
    %p87 = scmp.eq.s32.totalorder %s8, 7
    %p88 = por %p86, %p87
    %p89 = scmp.ne.s32.totalorder %s81, %s84
    %p90 = scmp.eq.s32.totalorder %s8, 0
    %p91 = por %p89, %p90
    %p92 = scmp.ne.s32.totalorder %s81, %s84
    %p93 = scmp.eq.s32.totalorder %s13, 7
    %p94 = por %p92, %p93
    %p95 = scmp.ne.s32.totalorder %s84, %s85
    %p96 = scmp.eq.s32.totalorder %s13, 0
    %p97 = por %p95, %p96
    %p98 = scmp.ne.s32.totalorder %s84, %s85
    %p99 = scmp.eq.s32.totalorder %s14, 7
    %p100 = por %p98, %p99
    %p102 = scmp.ne.s32.totalorder %s85, %s101
    %p103 = scmp.eq.s32.totalorder %s14, 0
    %p104 = por %p102, %p103
    %p105 = scmp.le.s32.totalorder 1, %s8
    %p106 = scmp.lt.s32.totalorder %s8, 9
    %p107 = pnand %p105, %p106
    %p108 = pneg %p107
    // Predicated region
    $region9: #{tpu_custom_call.1} parent=5 // pred_check
      _
    $region10: #{tpu_custom_call.1} parent=5 // pred_check_branch
      %110 = sbr.rel (%p107) target = $region12
    $region11: #{tpu_custom_call.1} parent=5 // pred_region
      %s111 = ssub.s32 %s8, 1
      // Predicated region
      $region13: #{tpu_custom_call.1} parent=11 // pred_check
        %p112 = pneg %p41
      $region14: #{tpu_custom_call.1} parent=11 // pred_check_branch
        %114 = sbr.rel (%p112) target = $region16
      $region15: #{tpu_custom_call.1} parent=11 // pred_region
        _
      $region16: #{tpu_custom_call.1} parent=11 // pred_fallthru
        _
    $region12: #{tpu_custom_call.1} parent=5 // pred_fallthru
      _
    %p115 = scmp.lt.s32.totalorder %s8, 8
    // Predicated region
    $region17: #{tpu_custom_call.1} parent=5 // pred_check
      %p116 = pneg %p115
    $region18: #{tpu_custom_call.1} parent=5 // pred_check_branch
      %118 = sbr.rel (%p116) target = $region20
    $region19: #{tpu_custom_call.1} parent=5 // pred_region
      // Predicated region
      $region21: #{tpu_custom_call.1} parent=19 // pred_check
        %p119 = pneg %p63
      $region22: #{tpu_custom_call.1} parent=19 // pred_check_branch
        %121 = sbr.rel (%p119) target = $region24
      $region23: #{tpu_custom_call.1} parent=19 // pred_region
        %s122 = smul.u32 8, %s15
        %p123 = scmp.lt.s32.totalorder %s122, 63
        %s124 = scalar_select %p123, %s122, 63
        %p125 = scmp.lt.s32.totalorder %s16, 0
        %s126 = scalar_select %p125, %s16, 0
        %s127 = sadd.s32 %s126, %s124
        %s128 = smul.addr %s127, 4
        %s129 = scalar_lea.vmem %s1, %s128
        %s130 = smul.u32 8, %s15
      $region24: #{tpu_custom_call.1} parent=19 // pred_fallthru
        _
    $region20: #{tpu_custom_call.1} parent=5 // pred_fallthru
      _
    %p131 = scmp.le.s32.totalorder 1, %s8
    %p132 = scmp.lt.s32.totalorder %s8, 9
    %p133 = pnand %p131, %p132
    %p134 = pneg %p133
    // Predicated region
    $region25: #{tpu_custom_call.1} parent=5 // pred_check
      _
    $region26: #{tpu_custom_call.1} parent=5 // pred_check_branch
      %136 = sbr.rel (%p133) target = $region28
    $region27: #{tpu_custom_call.1} parent=5 // pred_region
      %s137 = ssub.s32 %s8, 1
      %p138 = pneg %p41
      %p139 = pneg %p38
      %s140 = smul.u32 8, %s17
      %p141 = scmp.lt.s32.totalorder %s140, 63
      %s142 = scalar_select %p141, %s140, 63
      %p143 = scmp.lt.s32.totalorder %s18, 0
      %s144 = scalar_select %p143, %s18, 0
      %s145 = sadd.s32 %s144, %s142
      %s146 = smul.addr %s145, 4
      %s147 = scalar_lea.vmem %s1, %s146
      %p148 = pneg %p69
      %p149 = pneg %p66
      %p150 = pneg %p97
      %p151 = pneg %p94
      %p152 = scmp.lt.s32.totalorder %s17, 7
      %s153 = scalar_select %p152, %s17, 7
      %p154 = scmp.lt.s32.totalorder %s18, 0
      %s155 = scalar_select %p154, %s18, 0
      %s156 = sadd.s32 %s155, %s153
      %s157 = smul.addr %s156, 8
      %s158 = scalar_lea.vmem %s2, %s157
      %s159 = smul.u32 8, %s17
      %p160 = scmp.lt.s32.totalorder %s159, 63
      %s161 = scalar_select %p160, %s159, 63
      %p162 = scmp.lt.s32.totalorder %s18, 0
      %s163 = scalar_select %p162, %s18, 0
      %s164 = sadd.s32 %s163, %s161
      %s165 = smul.addr %s164, 4
      %s166 = scalar_lea.vmem %s1, %s165
      %s167 = smul.u32 8, %s17
      %p168 = scmp.lt.s32.totalorder %s17, 7
      %s169 = scalar_select %p168, %s17, 7
      %p170 = scmp.lt.s32.totalorder %s18, 0
      %s171 = scalar_select %p170, %s18, 0
      %s172 = sadd.s32 %s171, %s169
      %s173 = smul.addr %s172, 8
      %s174 = scalar_lea.vmem %s2, %s173
      %v175 = vld [vmem:[%s166] sm:$0x1]
      %v176 = vld [vmem:[%s166 + $0x4] sm:$0x1]
      %v177 = vld [vmem:[%s166 + $0x8] sm:$0x1]
      %v178 = vld [vmem:[%s166 + $0xc] sm:$0x1]
      %v179 = vld [vmem:[%s166 + $0x10] sm:$0x1]
      %v180 = vld [vmem:[%s166 + $0x14] sm:$0x1]
      %v181 = vld [vmem:[%s166 + $0x18] sm:$0x1]
      %v182 = vld [vmem:[%s166 + $0x1c] sm:$0x1]
      %v183 = vmul.f32 %v175, 0.17989805
      %v184 = vmul.f32 %v176, 0.17989805
      %v185 = vmul.f32 %v177, 0.17989805
      %v186 = vmul.f32 %v178, 0.17989805
      %v187 = vmul.f32 %v179, 0.17989805
      %v188 = vmul.f32 %v180, 0.17989805
      %v189 = vmul.f32 %v181, 0.17989805
      %v190 = vmul.f32 %v182, 0.17989805
      %v191 = vld [vmem:[%s166 + $0x1] sm:$0x1]
      %v192 = vld [vmem:[%s166 + $0x5] sm:$0x1]
      %v193 = vld [vmem:[%s166 + $0x9] sm:$0x1]
      %v194 = vld [vmem:[%s166 + $0xd] sm:$0x1]
      %v195 = vld [vmem:[%s166 + $0x11] sm:$0x1]
      %v196 = vld [vmem:[%s166 + $0x15] sm:$0x1]
      %v197 = vld [vmem:[%s166 + $0x19] sm:$0x1]
      %v198 = vld [vmem:[%s166 + $0x1d] sm:$0x1]
      %v199 = vmul.f32 %v191, 0.26175013
      %v200 = vmul.f32 %v192, 0.26175013
      %v201 = vmul.f32 %v193, 0.26175013
      %v202 = vmul.f32 %v194, 0.26175013
      %v203 = vmul.f32 %v195, 0.26175013
      %v204 = vmul.f32 %v196, 0.26175013
      %v205 = vmul.f32 %v197, 0.26175013
      %v206 = vmul.f32 %v198, 0.26175013
      %v207 = vadd.f32 %v183, %v199
      %v208 = vadd.f32 %v184, %v200
      %v209 = vadd.f32 %v185, %v201
      %v210 = vadd.f32 %v186, %v202
      %v211 = vadd.f32 %v187, %v203
      %v212 = vadd.f32 %v188, %v204
      %v213 = vadd.f32 %v189, %v205
      %v214 = vadd.f32 %v190, %v206
      %v215 = vld [vmem:[%s166 + $0x2] sm:$0x1]
      %v216 = vld [vmem:[%s166 + $0x6] sm:$0x1]
      %v217 = vld [vmem:[%s166 + $0xa] sm:$0x1]
      %v218 = vld [vmem:[%s166 + $0xe] sm:$0x1]
      %v219 = vld [vmem:[%s166 + $0x12] sm:$0x1]
      %v220 = vld [vmem:[%s166 + $0x16] sm:$0x1]
      %v221 = vld [vmem:[%s166 + $0x1a] sm:$0x1]
      %v222 = vld [vmem:[%s166 + $0x1e] sm:$0x1]
      %v223 = vmul.f32 %v215, 0.29660174
      %v224 = vmul.f32 %v216, 0.29660174
      %v225 = vmul.f32 %v217, 0.29660174
      %v226 = vmul.f32 %v218, 0.29660174
      %v227 = vmul.f32 %v219, 0.29660174
      %v228 = vmul.f32 %v220, 0.29660174
      %v229 = vmul.f32 %v221, 0.29660174
      %v230 = vmul.f32 %v222, 0.29660174
      %v231 = vadd.f32 %v207, %v223
      %v232 = vadd.f32 %v208, %v224
      %v233 = vadd.f32 %v209, %v225
      %v234 = vadd.f32 %v210, %v226
      %v235 = vadd.f32 %v211, %v227
      %v236 = vadd.f32 %v212, %v228
      %v237 = vadd.f32 %v213, %v229
      %v238 = vadd.f32 %v214, %v230
      %v239 = vld [vmem:[%s166 + $0x3] sm:$0x1]
      %v240 = vld [vmem:[%s166 + $0x7] sm:$0x1]
      %v241 = vld [vmem:[%s166 + $0xb] sm:$0x1]
      %v242 = vld [vmem:[%s166 + $0xf] sm:$0x1]
      %v243 = vld [vmem:[%s166 + $0x13] sm:$0x1]
      %v244 = vld [vmem:[%s166 + $0x17] sm:$0x1]
      %v245 = vld [vmem:[%s166 + $0x1b] sm:$0x1]
      %v246 = vld [vmem:[%s166 + $0x1f] sm:$0x1]
      %v247 = vmul.f32 %v239, 0.26175013
      %v248 = vmul.f32 %v240, 0.26175013
      %v249 = vmul.f32 %v241, 0.26175013
      %v250 = vmul.f32 %v242, 0.26175013
      %v251 = vmul.f32 %v243, 0.26175013
      %v252 = vmul.f32 %v244, 0.26175013
      %v253 = vmul.f32 %v245, 0.26175013
      %v254 = vmul.f32 %v246, 0.26175013
      %v255 = vadd.f32 %v231, %v247
      %v256 = vadd.f32 %v232, %v248
      %v257 = vadd.f32 %v233, %v249
      %v258 = vadd.f32 %v234, %v250
      %v259 = vadd.f32 %v235, %v251
      %v260 = vadd.f32 %v236, %v252
      %v261 = vadd.f32 %v237, %v253
      %v262 = vadd.f32 %v238, %v254
      %v263 = vld [vmem:[%s0] sm:$0xff]
      %v264 = vld [vmem:[%s0 + $0x8] sm:$0xff]
      %v265 = vld [vmem:[%s0 + $0x10] sm:$0xff]
      %v266 = vld [vmem:[%s0 + $0x18] sm:$0xff]
      %v275 = vrot.slane %v256, 7
      %vm276 = vcmask 1041409
      %v277 = vsel %vm276, %v275, %v255
      %v278 = vrot.slane %v257, 6
      %vm279 = vcmask 1042434
      %v280 = vsel %vm279, %v278, %v277
      %v281 = vrot.slane %v258, 5
      %vm282 = vcmask 1043459
      %v283 = vsel %vm282, %v281, %v280
      %v284 = vrot.slane %v259, 4
      %vm285 = vcmask 1044484
      %v286 = vsel %vm285, %v284, %v283
      %v287 = vrot.slane %v260, 3
      %vm288 = vcmask 1045509
      %v289 = vsel %vm288, %v287, %v286
      %v290 = vrot.slane %v261, 2
      %vm291 = vcmask 1046534
      %v292 = vsel %vm291, %v290, %v289
      %v293 = vrot.slane %v262, 1
      %vm294 = vcmask 1047559
      %v295 = vsel %vm294, %v293, %v292
      %vm296 = vcmask 261120
      %v297 = vsel %vm296, %v295, 0
      %299 = vmatprep.subr.mxu0 0.0
      %300 = vmatpush1.msra.mxu0 %v263
      %301 = vmatprep.subr.mxu0 0.0
      %302 = vmatpush1.msra.mxu0 %v264
      %303 = vmatprep.subr.mxu0 0.0
      %304 = vmatpush1.msra.mxu0 %v265
      %305 = vmatprep.subr.mxu0 0.0
      %306 = vmatpush1.msra.mxu0 %v266
      %307 = vmatprep.subr.mxu0 0.0
      %308 = vmatpush1.msra.mxu0 0.0
      %309 = vmatprep.subr.mxu0 0.0
      %310 = vmatpush1.msra.mxu0 0.0
      %311 = vmatprep.subr.mxu0 0.0
      %312 = vmatpush1.msra.mxu0 0.0
      %313 = vmatprep.subr.mxu0 0.0
      %314 = vmatpush1.msra.mxu0 0.0
      %315 = vmatprep.subr.mxu0 0.0
      %316 = vmatpush1.msra.mxu0 0.0
      %317 = vmatprep.subr.mxu0 0.0
      %318 = vmatpush1.msra.mxu0 0.0
      %319 = vmatprep.subr.mxu0 0.0
      %320 = vmatpush1.msra.mxu0 0.0
      %321 = vmatprep.subr.mxu0 0.0
      %322 = vmatpush1.msra.mxu0 0.0
      %323 = vmatprep.subr.mxu0 0.0
      %324 = vmatpush1.msra.mxu0 0.0
      %325 = vmatprep.subr.mxu0 0.0
      %326 = vmatpush1.msra.mxu0 0.0
      %327 = vmatprep.subr.mxu0 0.0
      %328 = vmatpush1.msra.mxu0 0.0
      %329 = vmatprep.subr.mxu0 0.0
      %330 = vmatpush1.msra.mxu0 0.0
      %331 = vmatprep.subr.mxu0 0.0
      %332 = vmatpush1.msra.mxu0 0.0
      %333 = vmatprep.subr.mxu0 0.0
      %334 = vmatpush1.msra.mxu0 0.0
      %335 = vmatprep.subr.mxu0 0.0
      %336 = vmatpush1.msra.mxu0 0.0
      %337 = vmatprep.subr.mxu0 0.0
      %338 = vmatpush1.msra.mxu0 0.0
      %339 = vmatprep.subr.mxu0 0.0
      %340 = vmatpush1.msra.mxu0 0.0
      %341 = vmatprep.subr.mxu0 0.0
      %342 = vmatpush1.msra.mxu0 0.0
      %343 = vmatprep.subr.mxu0 0.0
      %344 = vmatpush1.msra.mxu0 0.0
      %345 = vmatprep.subr.mxu0 0.0
      %346 = vmatpush1.msra.mxu0 0.0
      %347 = vmatprep.subr.mxu0 0.0
      %348 = vmatpush1.msra.mxu0 0.0
      %349 = vmatprep.subr.mxu0 0.0
      %350 = vmatpush1.msra.mxu0 0.0
      %351 = vmatprep.subr.mxu0 0.0
      %352 = vmatpush1.msra.mxu0 0.0
      %353 = vmatprep.subr.mxu0 0.0
      %354 = vmatpush1.msra.mxu0 0.0
      %355 = vmatprep.subr.mxu0 0.0
      %356 = vmatpush1.msra.mxu0 0.0
      %357 = vmatprep.subr.mxu0 0.0
      %358 = vmatpush1.msra.mxu0 0.0
      %359 = vmatprep.subr.mxu0 0.0
      %360 = vmatpush1.msra.mxu0 0.0
      %361 = vmatprep.subr.mxu0 0.0
      %362 = vmatpush1.msra.mxu0 0.0
      %363 = vmatprep.mubr.f32.mxu0 0.0
      %364 = vmatmul.mubr.f32.gmra.mrb[0].mxu0 %v297
      %v365 = vpop.f32.mrb[0].mxu0
      %v366 = vadd.f32 0.0, %v365
      %v367 = vpop.f32.mrb[0].mxu0
      %368 = vdwg.mxu0
      %vm369 = vcmask 64512
      %370 = vst.msk [vmem:[%s174] sm:$0xff] %vm369, %v366
      %p371 = scmp.lt.s32.totalorder %s17, 7
      %s372 = scalar_select %p371, %s17, 7
      %p373 = scmp.lt.s32.totalorder %s18, 0
      %s374 = scalar_select %p373, %s18, 0
      %s375 = sadd.s32 %s374, %s372
      %s376 = smul.addr %s375, 8
      %s377 = scalar_lea.vmem %s2, %s376
      // Predicated region
      $region29: #{tpu_custom_call.1} parent=27 // pred_check
        %p378 = pneg %p94
      $region30: #{tpu_custom_call.1} parent=27 // pred_check_branch
        %380 = sbr.rel (%p378) target = $region32
      $region31: #{tpu_custom_call.1} parent=27 // pred_region
        _
      $region32: #{tpu_custom_call.1} parent=27 // pred_fallthru
        _
    $region28: #{tpu_custom_call.1} parent=5 // pred_fallthru
      _
    %p381 = scmp.le.s32.totalorder 2, %s8
    // Predicated region
    $region33: #{tpu_custom_call.1} parent=5 // pred_check
      %p382 = pneg %p381
    $region34: #{tpu_custom_call.1} parent=5 // pred_check_branch
      %384 = sbr.rel (%p382) target = $region36
    $region35: #{tpu_custom_call.1} parent=5 // pred_region
      %s385 = ssub.s32 %s8, 2
      // Predicated region
      $region37: #{tpu_custom_call.1} parent=35 // pred_check
        %p386 = pneg %p100
      $region38: #{tpu_custom_call.1} parent=35 // pred_check_branch
        %388 = sbr.rel (%p386) target = $region40
      $region39: #{tpu_custom_call.1} parent=35 // pred_region
        %p389 = scmp.lt.s32.totalorder %s19, 7
        %s390 = scalar_select %p389, %s19, 7
        %p391 = scmp.lt.s32.totalorder %s20, 0
        %s392 = scalar_select %p391, %s20, 0
        %s393 = sadd.s32 %s392, %s390
        %s394 = smul.addr %s393, 8
        %s395 = scalar_lea.vmem %s2, %s394
      $region40: #{tpu_custom_call.1} parent=35 // pred_fallthru
        _
    $region36: #{tpu_custom_call.1} parent=5 // pred_fallthru
      _
  $region6: #{tpu_custom_call.1} parent=0 // loop_footer
    %s12 = sadd.s32 1, %s8
  $region7: #{tpu_custom_call.1} parent=0 // loop_footer_branch
    %7 = sbr.rel target = $region3
  $region8: #{tpu_custom_call.1} parent=0 // loop_exit
    _

</llo_original>
